<compile_context>
chip_gen: v7x
topology: tpu7x:2x2x1
jax: 0.10.0
libtpu: 0.0.40
codegen_flags: <defaults>
</compile_context>

<pallas_src>
import functools

import jax
import jax.numpy as jnp
import numpy as np
from jax.experimental import pallas as pl
from jax.experimental.pallas import tpu as pltpu

_LANE = 128


def _shift_kernel(shift_ref, img_ref, *refs, constant_pad):
    """Circularly shift a (TB, H, W) block of planes by (syi, sxi) rows/cols.

    shift_ref: SMEM int32[2] = [syi, sxi], already floor-modded into
               [0, H) / [0, W) on the host.
    For CONSTANT mode a resident (1, H, W) 0/1 multiplier (image dtype) zeroes
    the wrapped region.
    """
    if constant_pad:
        mask_ref, out_ref = refs
    else:
        (out_ref,) = refs
    _, H, _ = out_ref.shape

    syi = shift_ref[0]  # row shift in [0, H)
    sxi = shift_ref[1]  # col shift in [0, W)

    # Column (lane) circular shift: one dynamic XLU rotate, written straight
    # into the output block (resident in VMEM until writeback).
    out_ref[...] = pltpu.roll(img_ref[...], sxi, axis=2)

    # Row (sublane) circular shift: log2(H) static power-of-two rotates, each
    # applied in place only when the corresponding bit of syi is set.  The
    # scalar branch (pl.when) costs zero per-bit vector ops; the rolls ride
    # the otherwise-idle XLU in this DMA-bound kernel.
    amt = 1
    while amt < H:
        @pl.when((syi & amt) != 0)
        def _apply(amt=amt):
            out_ref[...] = pltpu.roll(out_ref[...], amt, axis=1)
        amt <<= 1

    if constant_pad:
        # Single multiply by the resident 0/1 mask (broadcast over planes).
        out_ref[...] = out_ref[...] * mask_ref[...]


def _pick_block_planes(planes, plane_bytes, target_block_bytes):
    """Largest plane count per block under the byte target.

    ~2 MiB blocks sit at/above the measured HBM-roofline knee on all
    generations while the ~7x-block live footprint (double-buffered in/out +
    roll temps) stays well inside even v7x's 64 MiB VMEM.  No divisor
    requirement: the grid uses pl.cdiv and Pallas handles the ragged tail.
    """
    return max(1, min(planes, target_block_bytes // max(plane_bytes, 1)))


def random_shift_pallas(image, shift_x, shift_y, pad_mode="CONSTANT",
                        block_bytes=2 << 20, vmem_limit_bytes=48 << 20):
    """RandomShift.forward_tensor_image with given host-int shifts (NCHW)."""
    N, C, H, W = image.shape
    constant_pad = pad_mode in ("black", "CONSTANT")
    shift_x = int(shift_x)
    shift_y = int(shift_y)

    planes = N * C
    out_W = W
    x = image.reshape(planes, H, W)

    # Lane-pad the width for CONSTANT mode so the output store stays a single
    # unmasked, lane-dense vst.  (Free: padded columns are zeroed by the mask
    # and sliced off afterwards.)
    if constant_pad and W % _LANE != 0:
        Wp = ((W + _LANE - 1) // _LANE) * _LANE
        x = jnp.pad(x, ((0, 0), (0, 0), (0, Wp - W)))
        W = Wp

    # Runtime SMEM scalars (already floor-modded) -> no recompile per shift.
    shifts = jnp.asarray([shift_y % H, shift_x % W], dtype=jnp.int32)

    plane_bytes = H * W * x.dtype.itemsize
    tb = _pick_block_planes(planes, plane_bytes, block_bytes)
    grid = (pl.cdiv(planes, tb),)

    in_specs = [pl.BlockSpec((tb, H, W), lambda i, s: (i, 0, 0))]
    args = [shifts, x]

    if constant_pad:
        # Host-built validity mask: out[y, x] reads img[y-sy, x-sx]; positions
        # that fall outside the ORIGINAL image are zeroed.  Uses the raw
        # (un-modded) shifts and the original width bound.
        rows = np.arange(H).reshape(H, 1)
        cols = np.arange(W).reshape(1, W)
        valid = ((rows >= shift_y) & (rows < H + shift_y) &
                 (cols >= shift_x) & (cols < out_W + shift_x))
        mask = jnp.asarray(valid[None], dtype=x.dtype)  # (1, H, W) 0/1
        # Constant block index -> stays resident in VMEM across grid steps.
        in_specs.append(pl.BlockSpec((1, H, W), lambda i, s: (0, 0, 0)))
        args.append(mask)

    kernel = functools.partial(_shift_kernel, constant_pad=constant_pad)

    out = pl.pallas_call(
        kernel,
        out_shape=jax.ShapeDtypeStruct((planes, H, W), x.dtype),
        grid_spec=pltpu.PrefetchScalarGridSpec(
            num_scalar_prefetch=1,
            grid=grid,
            in_specs=in_specs,
            out_specs=pl.BlockSpec((tb, H, W), lambda i, s: (i, 0, 0)),
        ),
        compiler_params=pltpu.CompilerParams(
            # 'parallel' lets multi-TC chips (v7x) shard the plane axis; it is
            # a no-op on single-TC v5e/v6e.
            dimension_semantics=("parallel",),
            vmem_limit_bytes=vmem_limit_bytes,
        ),
    )(*args)

    return out[:, :, :out_W].reshape(N, C, H, out_W)


def random_shift_reference(image, shift_x, shift_y, pad_mode="CONSTANT"):
    """Pure-JAX mirror of forward_tensor_image (mosaic + window slice)."""
    N, C, H, W = image.shape
    if pad_mode in ("black", "CONSTANT"):
        mosaic = jnp.zeros((N, C, 3 * H, 3 * W), image.dtype)
        mosaic = mosaic.at[:, :, H:2 * H, W:2 * W].set(image)
    else:
        mosaic = jnp.tile(image, (1, 1, 3, 3))
    return mosaic[:, :, H - shift_y:2 * H - shift_y,
                  W - shift_x:2 * W - shift_x]


if __name__ == "__main__":
    key = jax.random.PRNGKey(0)
    k_img, k_img2, k_u = jax.random.split(key, 3)

    # Small NCHW batch consistent with the module's tensor forward path.
    N, C, H, W = 2, 4, 16, 128
    image = jax.random.normal(k_img, (N, C, H, W), dtype=jnp.float32)

    scale_x = 0.5
    u = jax.random.uniform(k_u, (2,))
    paste_rel_x = float(u[0])
    # Faithful to forward_tensor_image: BOTH shifts use scale_x and paste_rel_x.
    shift_x = int(W * scale_x * (2 * paste_rel_x - 1))
    shift_y = int(H * scale_x * (2 * paste_rel_x - 1))

    # Several shift values reuse the same kernel structure (runtime scalars).
    shift_cases = [(shift_x, shift_y), (-shift_x - 3, -shift_y - 1), (0, 0)]
    for pad_mode in ("CONSTANT", "WRAP"):
        for sx, sy in shift_cases:
            out = jax.block_until_ready(
                random_shift_pallas(image, sx, sy, pad_mode=pad_mode))
            ref = random_shift_reference(image, sx, sy, pad_mode=pad_mode)
            np.testing.assert_allclose(
                np.asarray(out), np.asarray(ref), rtol=0, atol=0)

    # Exercise the multi-step grid + ragged last block path
    # (planes=8, tb=3 -> grid=3, last block partially out of bounds).
    plane_bytes = H * W * 4
    for pad_mode in ("CONSTANT", "WRAP"):
        out = jax.block_until_ready(
            random_shift_pallas(image, shift_x, shift_y, pad_mode=pad_mode,
                                block_bytes=3 * plane_bytes))
        ref = random_shift_reference(image, shift_x, shift_y, pad_mode=pad_mode)
        np.testing.assert_allclose(
            np.asarray(out), np.asarray(ref), rtol=0, atol=0)

    # CONSTANT with a non-128-multiple width exercises the lane-pad path.
    Wr = 96
    image_r = jax.random.normal(k_img2, (N, C, H, Wr), dtype=jnp.float32)
    for sx, sy in ((11, -3), (-17, 5)):
        out = jax.block_until_ready(
            random_shift_pallas(image_r, sx, sy, pad_mode="CONSTANT"))
        ref = random_shift_reference(image_r, sx, sy, pad_mode="CONSTANT")
        np.testing.assert_allclose(
            np.asarray(out), np.asarray(ref), rtol=0, atol=0)

    print("KERNEL_OK")
</pallas_src>

<mosaic_0001>
module attributes {stable_mosaic.version = 11 : i64} {
  func.func @_shift_kernel(%arg0: i32, %arg1: memref<2xi32, #tpu.memory_space<smem>>, %arg2: memref<8x16x128xf32, #tpu.memory_space<vmem>>, %arg3: memref<1x16x128xf32, #tpu.memory_space<vmem>>, %arg4: memref<8x16x128xf32, #tpu.memory_space<vmem>>) attributes {dimension_semantics = [#tpu.dimension_semantics<parallel>], iteration_bounds = array<i64: 1>, scalar_prefetch = 1 : i64, scratch_operands = 0 : i64, tpu.core_type = #tpu.core_type<tc>, window_params = [{transform_indices = @transform_0, window_bounds = array<i64: 8, 16, 128>}, {pipeline_mode = #tpu.pipeline_mode<synchronous>, transform_indices = @transform_1, window_bounds = array<i64: 1, 16, 128>}, {transform_indices = @transform_2, window_bounds = array<i64: 8, 16, 128>}]} {
    %c0 = arith.constant 0 : index
    %0 = memref.load %arg1[%c0] : memref<2xi32, #tpu.memory_space<smem>>
    %c1 = arith.constant 1 : index
    %1 = memref.load %arg1[%c1] : memref<2xi32, #tpu.memory_space<smem>>
    %c0_0 = arith.constant 0 : index
    %c0_1 = arith.constant 0 : index
    %c0_2 = arith.constant 0 : index
    %2 = vector.load %arg2[%c0_0, %c0_1, %c0_2] : memref<8x16x128xf32, #tpu.memory_space<vmem>>, vector<8x16x128xf32>
    %3 = tpu.dynamic_rotate %2 by %1 dim 2 : vector<8x16x128xf32>, i32 -> vector<8x16x128xf32>
    %c0_3 = arith.constant 0 : index
    %c0_4 = arith.constant 0 : index
    %c0_5 = arith.constant 0 : index
    %4 = vector.load %arg4[%c0_3, %c0_4, %c0_5] : memref<8x16x128xf32, #tpu.memory_space<vmem>>, vector<8x16x128xf32>
    tpu.vector_store %arg4[%c0_3, %c0_4, %c0_5], %3 {strides = array<i32>} : memref<8x16x128xf32, #tpu.memory_space<vmem>>, vector<8x16x128xf32>,
    %c1_i32 = arith.constant 1 : i32
    %5 = arith.andi %0, %c1_i32 : i32
    %c0_i32 = arith.constant 0 : i32
    %6 = arith.cmpi ne, %5, %c0_i32 : i32
    %7 = arith.extui %6 : i1 to i32
    %c0_i32_6 = arith.constant 0 : i32
    %8 = arith.cmpi ne, %7, %c0_i32_6 : i32
    scf.if %8 {
      %c0_22 = arith.constant 0 : index
      %c0_23 = arith.constant 0 : index
      %c0_24 = arith.constant 0 : index
      %26 = vector.load %arg4[%c0_22, %c0_23, %c0_24] : memref<8x16x128xf32, #tpu.memory_space<vmem>>, vector<8x16x128xf32>
      %c1_i32_25 = arith.constant 1 : i32
      %27 = tpu.dynamic_rotate %26 by %c1_i32_25 dim 1 : vector<8x16x128xf32>, i32 -> vector<8x16x128xf32>
      %c0_26 = arith.constant 0 : index
      %c0_27 = arith.constant 0 : index
      %c0_28 = arith.constant 0 : index
      %28 = vector.load %arg4[%c0_26, %c0_27, %c0_28] : memref<8x16x128xf32, #tpu.memory_space<vmem>>, vector<8x16x128xf32>
      tpu.vector_store %arg4[%c0_26, %c0_27, %c0_28], %27 {strides = array<i32>} : memref<8x16x128xf32, #tpu.memory_space<vmem>>, vector<8x16x128xf32>,
    } else {
    }
    %c2_i32 = arith.constant 2 : i32
    %9 = arith.andi %0, %c2_i32 : i32
    %c0_i32_7 = arith.constant 0 : i32
    %10 = arith.cmpi ne, %9, %c0_i32_7 : i32
    %11 = arith.extui %10 : i1 to i32
    %c0_i32_8 = arith.constant 0 : i32
    %12 = arith.cmpi ne, %11, %c0_i32_8 : i32
    scf.if %12 {
      %c0_22 = arith.constant 0 : index
      %c0_23 = arith.constant 0 : index
      %c0_24 = arith.constant 0 : index
      %26 = vector.load %arg4[%c0_22, %c0_23, %c0_24] : memref<8x16x128xf32, #tpu.memory_space<vmem>>, vector<8x16x128xf32>
      %c2_i32_25 = arith.constant 2 : i32
      %27 = tpu.dynamic_rotate %26 by %c2_i32_25 dim 1 : vector<8x16x128xf32>, i32 -> vector<8x16x128xf32>
      %c0_26 = arith.constant 0 : index
      %c0_27 = arith.constant 0 : index
      %c0_28 = arith.constant 0 : index
      %28 = vector.load %arg4[%c0_26, %c0_27, %c0_28] : memref<8x16x128xf32, #tpu.memory_space<vmem>>, vector<8x16x128xf32>
      tpu.vector_store %arg4[%c0_26, %c0_27, %c0_28], %27 {strides = array<i32>} : memref<8x16x128xf32, #tpu.memory_space<vmem>>, vector<8x16x128xf32>,
    } else {
    }
    %c4_i32 = arith.constant 4 : i32
    %13 = arith.andi %0, %c4_i32 : i32
    %c0_i32_9 = arith.constant 0 : i32
    %14 = arith.cmpi ne, %13, %c0_i32_9 : i32
    %15 = arith.extui %14 : i1 to i32
    %c0_i32_10 = arith.constant 0 : i32
    %16 = arith.cmpi ne, %15, %c0_i32_10 : i32
    scf.if %16 {
      %c0_22 = arith.constant 0 : index
      %c0_23 = arith.constant 0 : index
      %c0_24 = arith.constant 0 : index
      %26 = vector.load %arg4[%c0_22, %c0_23, %c0_24] : memref<8x16x128xf32, #tpu.memory_space<vmem>>, vector<8x16x128xf32>
      %c4_i32_25 = arith.constant 4 : i32
      %27 = tpu.dynamic_rotate %26 by %c4_i32_25 dim 1 : vector<8x16x128xf32>, i32 -> vector<8x16x128xf32>
      %c0_26 = arith.constant 0 : index
      %c0_27 = arith.constant 0 : index
      %c0_28 = arith.constant 0 : index
      %28 = vector.load %arg4[%c0_26, %c0_27, %c0_28] : memref<8x16x128xf32, #tpu.memory_space<vmem>>, vector<8x16x128xf32>
      tpu.vector_store %arg4[%c0_26, %c0_27, %c0_28], %27 {strides = array<i32>} : memref<8x16x128xf32, #tpu.memory_space<vmem>>, vector<8x16x128xf32>,
    } else {
    }
    %c8_i32 = arith.constant 8 : i32
    %17 = arith.andi %0, %c8_i32 : i32
    %c0_i32_11 = arith.constant 0 : i32
    %18 = arith.cmpi ne, %17, %c0_i32_11 : i32
    %19 = arith.extui %18 : i1 to i32
    %c0_i32_12 = arith.constant 0 : i32
    %20 = arith.cmpi ne, %19, %c0_i32_12 : i32
    scf.if %20 {
      %c0_22 = arith.constant 0 : index
      %c0_23 = arith.constant 0 : index
      %c0_24 = arith.constant 0 : index
      %26 = vector.load %arg4[%c0_22, %c0_23, %c0_24] : memref<8x16x128xf32, #tpu.memory_space<vmem>>, vector<8x16x128xf32>
      %c8_i32_25 = arith.constant 8 : i32
      %27 = tpu.dynamic_rotate %26 by %c8_i32_25 dim 1 : vector<8x16x128xf32>, i32 -> vector<8x16x128xf32>
      %c0_26 = arith.constant 0 : index
      %c0_27 = arith.constant 0 : index
      %c0_28 = arith.constant 0 : index
      %28 = vector.load %arg4[%c0_26, %c0_27, %c0_28] : memref<8x16x128xf32, #tpu.memory_space<vmem>>, vector<8x16x128xf32>
      tpu.vector_store %arg4[%c0_26, %c0_27, %c0_28], %27 {strides = array<i32>} : memref<8x16x128xf32, #tpu.memory_space<vmem>>, vector<8x16x128xf32>,
    } else {
    }
    %c0_13 = arith.constant 0 : index
    %c0_14 = arith.constant 0 : index
    %c0_15 = arith.constant 0 : index
    %21 = vector.load %arg4[%c0_13, %c0_14, %c0_15] : memref<8x16x128xf32, #tpu.memory_space<vmem>>, vector<8x16x128xf32>
    %c0_16 = arith.constant 0 : index
    %c0_17 = arith.constant 0 : index
    %c0_18 = arith.constant 0 : index
    %22 = vector.load %arg3[%c0_16, %c0_17, %c0_18] : memref<1x16x128xf32, #tpu.memory_space<vmem>>, vector<1x16x128xf32>
    %23 = vector.broadcast %22 : vector<1x16x128xf32> to vector<8x16x128xf32>
    %24 = arith.mulf %21, %23 : vector<8x16x128xf32>
    %c0_19 = arith.constant 0 : index
    %c0_20 = arith.constant 0 : index
    %c0_21 = arith.constant 0 : index
    %25 = vector.load %arg4[%c0_19, %c0_20, %c0_21] : memref<8x16x128xf32, #tpu.memory_space<vmem>>, vector<8x16x128xf32>
    tpu.vector_store %arg4[%c0_19, %c0_20, %c0_21], %24 {strides = array<i32>} : memref<8x16x128xf32, #tpu.memory_space<vmem>>, vector<8x16x128xf32>,
    return
  }
  func.func @transform_0(%arg0: i32, %arg1: memref<2xi32, #tpu.memory_space<smem>>) -> (i32, i32, i32) {
    %c0_i32 = arith.constant 0 : i32
    %c0_i32_0 = arith.constant 0 : i32
    %c0_i32_1 = arith.constant 0 : i32
    return %arg0, %c0_i32, %c0_i32_0 : i32, i32, i32
  }
  func.func @transform_1(%arg0: i32, %arg1: memref<2xi32, #tpu.memory_space<smem>>) -> (i32, i32, i32) {
    %c0_i32 = arith.constant 0 : i32
    %c0_i32_0 = arith.constant 0 : i32
    %c0_i32_1 = arith.constant 0 : i32
    %c0_i32_2 = arith.constant 0 : i32
    return %c0_i32, %c0_i32_0, %c0_i32_1 : i32, i32, i32
  }
  func.func @transform_2(%arg0: i32, %arg1: memref<2xi32, #tpu.memory_space<smem>>) -> (i32, i32, i32) {
    %c0_i32 = arith.constant 0 : i32
    %c0_i32_0 = arith.constant 0 : i32
    %c0_i32_1 = arith.constant 0 : i32
    return %arg0, %c0_i32, %c0_i32_0 : i32, i32, i32
  }
}

</mosaic_0001>

<llo_original>
// kernel: tpu_custom_call.1
$region0: #{tpu_custom_call.1}
  #allocation0 [shape = 'u32[]', space=smem, size = 0x4, offset = 0x4, fixed_abs, tag = 'smem constant byte address 0x4 - core index']
  #allocation1 [shape = 'u32[144,128]{1,0:T(1,128)}', space=vmem, size = 0x12000, scoped, tag = 'internal scratch']
  #allocation2 [shape = 's32[1]{0}', space=sflag, size = 0x4, scoped, tag = 'scoped memory for tpu_custom_call.1']
  #allocation3 [shape = 'u8[512]{0}', space=smem, size = 0x200, scoped, tag = 'prefetched SMEM operand 0']
  %s0 = inlined_call_operand.hbm [shape: s32[2], index: 0, kind: input, shape index: {}]
  %s1 = inlined_call_operand.hbm [shape: f32[8,16,128], index: 1, kind: input, shape index: {}]
  %s2 = inlined_call_operand.hbm [shape: f32[1,16,128], index: 2, kind: input, shape index: {}]
  %s3 = inlined_call_operand.hbm [shape: f32[8,16,128], index: 3, kind: output, shape index: {}]
  %s4 = sld [smem:[#allocation0]]
  $region42: #{tpu_custom_call.1} parent=0
    _
  %s6 = ssub.s32 1, %s4
  %s7 = scalar_select 0, %s6, %s4
  %9 = dma.hbm_to_smem %s0, 16, [#allocation3], [#allocation2]
  %10 = dma.done [#allocation2], 16
  %11 = sfence
  $region1: #{tpu_custom_call.1} parent=0
    #allocation4 [shape = 'u8[65536]{0}', space=vmem, size = 0x10000, scoped, tag = 'input window, operand 1, single buffered']
    #allocation5 [shape = 's32[1]{0}', space=sflag, size = 0x4, scoped, tag = 'scoped memory for tpu_custom_call.1']
    #allocation6 [shape = 's32[1]{0}', space=sflag, size = 0x4, scoped, tag = 'scoped memory for tpu_custom_call.1']
    #allocation7 [shape = 'u8[8192]{0}', space=vmem, size = 0x2000, scoped, tag = 'input window, operand 2, single buffered']
    #allocation8 [shape = 's32[1]{0}', space=sflag, size = 0x4, scoped, tag = 'scoped memory for tpu_custom_call.1']
    #allocation9 [shape = 'u8[65536]{0}', space=vmem, size = 0x10000, scoped, tag = 'output window, operand 0, single buffered']
    %12 = vsyncpa [#allocation5], 0
    %13 = vsyncpa [#allocation8], 0
    %14 = vsyncpa [#allocation6], 0
    // Predicated region
    $region2: #{tpu_custom_call.1} parent=1 // pred_check
      _
    $region3: #{tpu_custom_call.1} parent=1 // pred_check_branch
      %16 = sbr.rel (0) target = $region5
    $region4: #{tpu_custom_call.1} parent=1 // pred_region
      %s18 = ssub.s32 2048, 2048
      %19 = vsyncadd [#allocation5], %s18
      %s20 = sshll.u32 [#allocation4], 4
      %s21 = int_to_ptr.vmem [resolvable:$true] %s20
      %26 = dma.hbm_to_vmem [thread:$0]  %s1, 2048, %s21, [#allocation5], 128, 128, 8
    $region5: #{tpu_custom_call.1} parent=1 // pred_fallthru
      _
    // Predicated region
    $region6: #{tpu_custom_call.1} parent=1 // pred_check
      _
    $region7: #{tpu_custom_call.1} parent=1 // pred_check_branch
      %28 = sbr.rel (0) target = $region9
    $region8: #{tpu_custom_call.1} parent=1 // pred_region
      %s30 = ssub.s32 256, 256
      %31 = vsyncadd [#allocation8], %s30
      %s32 = sshll.u32 [#allocation7], 4
      %s33 = int_to_ptr.vmem [resolvable:$true] %s32
      %38 = dma.hbm_to_vmem [thread:$0]  %s2, 256, %s33, [#allocation8], 128, 128, 8
    $region9: #{tpu_custom_call.1} parent=1 // pred_fallthru
      _
    // Predicated region
    $region10: #{tpu_custom_call.1} parent=1 // pred_check
      _
    $region11: #{tpu_custom_call.1} parent=1 // pred_check_branch
      %40 = sbr.rel (0) target = $region13
    $region12: #{tpu_custom_call.1} parent=1 // pred_region
      %41 = dma.done [#allocation5], 2048
    $region13: #{tpu_custom_call.1} parent=1 // pred_fallthru
      _
    // Predicated region
    $region14: #{tpu_custom_call.1} parent=1 // pred_check
      _
    $region15: #{tpu_custom_call.1} parent=1 // pred_check_branch
      %43 = sbr.rel (0) target = $region17
    $region16: #{tpu_custom_call.1} parent=1 // pred_region
      %44 = dma.done [#allocation8], 256
    $region17: #{tpu_custom_call.1} parent=1 // pred_fallthru
      _
    %s45 = sld [smem:[#allocation3]]
    %s46 = sld [smem:[#allocation3 + $0x1]]
    %v47 = vld [vmem:[#allocation4] sm:$0xff]
    %v48 = vld [vmem:[#allocation4 + $0x8] sm:$0xff]
    %v49 = vld [vmem:[#allocation4 + $0x10] sm:$0xff]
    %v50 = vld [vmem:[#allocation4 + $0x18] sm:$0xff]
    %v51 = vld [vmem:[#allocation4 + $0x20] sm:$0xff]
    %v52 = vld [vmem:[#allocation4 + $0x28] sm:$0xff]
    %v53 = vld [vmem:[#allocation4 + $0x30] sm:$0xff]
    %v54 = vld [vmem:[#allocation4 + $0x38] sm:$0xff]
    %v55 = vld [vmem:[#allocation4 + $0x40] sm:$0xff]
    %v56 = vld [vmem:[#allocation4 + $0x48] sm:$0xff]
    %v57 = vld [vmem:[#allocation4 + $0x50] sm:$0xff]
    %v58 = vld [vmem:[#allocation4 + $0x58] sm:$0xff]
    %v59 = vld [vmem:[#allocation4 + $0x60] sm:$0xff]
    %v60 = vld [vmem:[#allocation4 + $0x68] sm:$0xff]
    %v61 = vld [vmem:[#allocation4 + $0x70] sm:$0xff]
    %v62 = vld [vmem:[#allocation4 + $0x78] sm:$0xff]
    %s63 = sand.u32 %s46, 127
    %s64 = sand.u32 %s63, 127
    %65 = vrot.lane.b32.xlu0 %v47, %s64
    %v66 = vpop.permute.xlu0 %65
    %67 = vrot.lane.b32.xlu0 %v48, %s64
    %v68 = vpop.permute.xlu0 %67
    %69 = vrot.lane.b32.xlu0 %v49, %s64
    %v70 = vpop.permute.xlu0 %69
    %71 = vrot.lane.b32.xlu0 %v50, %s64
    %v72 = vpop.permute.xlu0 %71
    %73 = vrot.lane.b32.xlu0 %v51, %s64
    %v74 = vpop.permute.xlu0 %73
    %75 = vrot.lane.b32.xlu0 %v52, %s64
    %v76 = vpop.permute.xlu0 %75
    %77 = vrot.lane.b32.xlu0 %v53, %s64
    %v78 = vpop.permute.xlu0 %77
    %79 = vrot.lane.b32.xlu0 %v54, %s64
    %v80 = vpop.permute.xlu0 %79
    %81 = vrot.lane.b32.xlu0 %v55, %s64
    %v82 = vpop.permute.xlu0 %81
    %83 = vrot.lane.b32.xlu0 %v56, %s64
    %v84 = vpop.permute.xlu0 %83
    %85 = vrot.lane.b32.xlu0 %v57, %s64
    %v86 = vpop.permute.xlu0 %85
    %87 = vrot.lane.b32.xlu0 %v58, %s64
    %v88 = vpop.permute.xlu0 %87
    %89 = vrot.lane.b32.xlu0 %v59, %s64
    %v90 = vpop.permute.xlu0 %89
    %91 = vrot.lane.b32.xlu0 %v60, %s64
    %v92 = vpop.permute.xlu0 %91
    %93 = vrot.lane.b32.xlu0 %v61, %s64
    %v94 = vpop.permute.xlu0 %93
    %95 = vrot.lane.b32.xlu0 %v62, %s64
    %v96 = vpop.permute.xlu0 %95
    %97 = vst [vmem:[#allocation9] sm:$0xff] %v66
    %98 = vst [vmem:[#allocation9 + $0x8] sm:$0xff] %v68
    %99 = vst [vmem:[#allocation9 + $0x10] sm:$0xff] %v70
    %100 = vst [vmem:[#allocation9 + $0x18] sm:$0xff] %v72
    %101 = vst [vmem:[#allocation9 + $0x20] sm:$0xff] %v74
    %102 = vst [vmem:[#allocation9 + $0x28] sm:$0xff] %v76
    %103 = vst [vmem:[#allocation9 + $0x30] sm:$0xff] %v78
    %104 = vst [vmem:[#allocation9 + $0x38] sm:$0xff] %v80
    %105 = vst [vmem:[#allocation9 + $0x40] sm:$0xff] %v82
    %106 = vst [vmem:[#allocation9 + $0x48] sm:$0xff] %v84
    %107 = vst [vmem:[#allocation9 + $0x50] sm:$0xff] %v86
    %108 = vst [vmem:[#allocation9 + $0x58] sm:$0xff] %v88
    %109 = vst [vmem:[#allocation9 + $0x60] sm:$0xff] %v90
    %110 = vst [vmem:[#allocation9 + $0x68] sm:$0xff] %v92
    %111 = vst [vmem:[#allocation9 + $0x70] sm:$0xff] %v94
    %112 = vst [vmem:[#allocation9 + $0x78] sm:$0xff] %v96
    %s113 = sand.u32 %s45, 1
    %p114 = scmp.ne.s32.totalorder %s113, 0
    // Predicated region
    $region18: #{tpu_custom_call.1} parent=1 // pred_check
      %p115 = pneg %p114
    $region19: #{tpu_custom_call.1} parent=1 // pred_check_branch
      %117 = sbr.rel (%p115) target = $region21
    $region20: #{tpu_custom_call.1} parent=1 // pred_region
      %v118 = vld [vmem:[#allocation9] sm:$0xff]
      %v119 = vld [vmem:[#allocation9 + $0x8] sm:$0xff]
      %v120 = vld [vmem:[#allocation9 + $0x10] sm:$0xff]
      %v121 = vld [vmem:[#allocation9 + $0x18] sm:$0xff]
      %v122 = vld [vmem:[#allocation9 + $0x20] sm:$0xff]
      %v123 = vld [vmem:[#allocation9 + $0x28] sm:$0xff]
      %v124 = vld [vmem:[#allocation9 + $0x30] sm:$0xff]
      %v125 = vld [vmem:[#allocation9 + $0x38] sm:$0xff]
      %v126 = vld [vmem:[#allocation9 + $0x40] sm:$0xff]
      %v127 = vld [vmem:[#allocation9 + $0x48] sm:$0xff]
      %v128 = vld [vmem:[#allocation9 + $0x50] sm:$0xff]
      %v129 = vld [vmem:[#allocation9 + $0x58] sm:$0xff]
      %v130 = vld [vmem:[#allocation9 + $0x60] sm:$0xff]
      %v131 = vld [vmem:[#allocation9 + $0x68] sm:$0xff]
      %v132 = vld [vmem:[#allocation9 + $0x70] sm:$0xff]
      %v133 = vld [vmem:[#allocation9 + $0x78] sm:$0xff]
      %v134 = vrot.slane %v118, 7
      %v135 = vrot.slane %v120, 7
      %v136 = vrot.slane %v122, 7
      %v137 = vrot.slane %v124, 7
      %v138 = vrot.slane %v126, 7
      %v139 = vrot.slane %v128, 7
      %v140 = vrot.slane %v130, 7
      %v141 = vrot.slane %v132, 7
      %v142 = vrot.slane %v119, 7
      %v143 = vrot.slane %v121, 7
      %v144 = vrot.slane %v123, 7
      %v145 = vrot.slane %v125, 7
      %v146 = vrot.slane %v127, 7
      %v147 = vrot.slane %v129, 7
      %v148 = vrot.slane %v131, 7
      %v149 = vrot.slane %v133, 7
      %v150 = vlaneseq
      %v151 = vshrl.u32 %v150, 7
      %vm152 = vcmp.lt.s32.totalorder %v151, 1
      %v153 = vsel %vm152, %v134, %v142
      %v154 = vsel %vm152, %v135, %v143
      %v155 = vsel %vm152, %v136, %v144
      %v156 = vsel %vm152, %v137, %v145
      %v157 = vsel %vm152, %v138, %v146
      %v158 = vsel %vm152, %v139, %v147
      %v159 = vsel %vm152, %v140, %v148
      %v160 = vsel %vm152, %v141, %v149
      %v161 = vsel %vm152, %v142, %v134
      %v162 = vsel %vm152, %v143, %v135
      %v163 = vsel %vm152, %v144, %v136
      %v164 = vsel %vm152, %v145, %v137
      %v165 = vsel %vm152, %v146, %v138
      %v166 = vsel %vm152, %v147, %v139
      %v167 = vsel %vm152, %v148, %v140
      %v168 = vsel %vm152, %v149, %v141
      %169 = vst [vmem:[#allocation9] sm:$0xff] %v161
      %170 = vst [vmem:[#allocation9 + $0x8] sm:$0xff] %v153
      %171 = vst [vmem:[#allocation9 + $0x10] sm:$0xff] %v162
      %172 = vst [vmem:[#allocation9 + $0x18] sm:$0xff] %v154
      %173 = vst [vmem:[#allocation9 + $0x20] sm:$0xff] %v163
      %174 = vst [vmem:[#allocation9 + $0x28] sm:$0xff] %v155
      %175 = vst [vmem:[#allocation9 + $0x30] sm:$0xff] %v164
      %176 = vst [vmem:[#allocation9 + $0x38] sm:$0xff] %v156
      %177 = vst [vmem:[#allocation9 + $0x40] sm:$0xff] %v165
      %178 = vst [vmem:[#allocation9 + $0x48] sm:$0xff] %v157
      %179 = vst [vmem:[#allocation9 + $0x50] sm:$0xff] %v166
      %180 = vst [vmem:[#allocation9 + $0x58] sm:$0xff] %v158
      %181 = vst [vmem:[#allocation9 + $0x60] sm:$0xff] %v167
      %182 = vst [vmem:[#allocation9 + $0x68] sm:$0xff] %v159
      %183 = vst [vmem:[#allocation9 + $0x70] sm:$0xff] %v168
      %184 = vst [vmem:[#allocation9 + $0x78] sm:$0xff] %v160
    $region21: #{tpu_custom_call.1} parent=1 // pred_fallthru
      _
    %s185 = sand.u32 %s45, 2
    %p186 = scmp.ne.s32.totalorder %s185, 0
    // Predicated region
    $region22: #{tpu_custom_call.1} parent=1 // pred_check
      %p187 = pneg %p186
    $region23: #{tpu_custom_call.1} parent=1 // pred_check_branch
      %189 = sbr.rel (%p187) target = $region25
    $region24: #{tpu_custom_call.1} parent=1 // pred_region
      %v190 = vld [vmem:[#allocation9] sm:$0xff]
      %v191 = vld [vmem:[#allocation9 + $0x8] sm:$0xff]
      %v192 = vld [vmem:[#allocation9 + $0x10] sm:$0xff]
      %v193 = vld [vmem:[#allocation9 + $0x18] sm:$0xff]
      %v194 = vld [vmem:[#allocation9 + $0x20] sm:$0xff]
      %v195 = vld [vmem:[#allocation9 + $0x28] sm:$0xff]
      %v196 = vld [vmem:[#allocation9 + $0x30] sm:$0xff]
      %v197 = vld [vmem:[#allocation9 + $0x38] sm:$0xff]
      %v198 = vld [vmem:[#allocation9 + $0x40] sm:$0xff]
      %v199 = vld [vmem:[#allocation9 + $0x48] sm:$0xff]
      %v200 = vld [vmem:[#allocation9 + $0x50] sm:$0xff]
      %v201 = vld [vmem:[#allocation9 + $0x58] sm:$0xff]
      %v202 = vld [vmem:[#allocation9 + $0x60] sm:$0xff]
      %v203 = vld [vmem:[#allocation9 + $0x68] sm:$0xff]
      %v204 = vld [vmem:[#allocation9 + $0x70] sm:$0xff]
      %v205 = vld [vmem:[#allocation9 + $0x78] sm:$0xff]
      %v206 = vrot.slane %v190, 6
      %v207 = vrot.slane %v192, 6
      %v208 = vrot.slane %v194, 6
      %v209 = vrot.slane %v196, 6
      %v210 = vrot.slane %v198, 6
      %v211 = vrot.slane %v200, 6
      %v212 = vrot.slane %v202, 6
      %v213 = vrot.slane %v204, 6
      %v214 = vrot.slane %v191, 6
      %v215 = vrot.slane %v193, 6
      %v216 = vrot.slane %v195, 6
      %v217 = vrot.slane %v197, 6
      %v218 = vrot.slane %v199, 6
      %v219 = vrot.slane %v201, 6
      %v220 = vrot.slane %v203, 6
      %v221 = vrot.slane %v205, 6
      %v222 = vlaneseq
      %v223 = vshrl.u32 %v222, 7
      %vm224 = vcmp.lt.s32.totalorder %v223, 2
      %v225 = vsel %vm224, %v206, %v214
      %v226 = vsel %vm224, %v207, %v215
      %v227 = vsel %vm224, %v208, %v216
      %v228 = vsel %vm224, %v209, %v217
      %v229 = vsel %vm224, %v210, %v218
      %v230 = vsel %vm224, %v211, %v219
      %v231 = vsel %vm224, %v212, %v220
      %v232 = vsel %vm224, %v213, %v221
      %v233 = vsel %vm224, %v214, %v206
      %v234 = vsel %vm224, %v215, %v207
      %v235 = vsel %vm224, %v216, %v208
      %v236 = vsel %vm224, %v217, %v209
      %v237 = vsel %vm224, %v218, %v210
      %v238 = vsel %vm224, %v219, %v211
      %v239 = vsel %vm224, %v220, %v212
      %v240 = vsel %vm224, %v221, %v213
      %241 = vst [vmem:[#allocation9] sm:$0xff] %v233
      %242 = vst [vmem:[#allocation9 + $0x8] sm:$0xff] %v225
      %243 = vst [vmem:[#allocation9 + $0x10] sm:$0xff] %v234
      %244 = vst [vmem:[#allocation9 + $0x18] sm:$0xff] %v226
      %245 = vst [vmem:[#allocation9 + $0x20] sm:$0xff] %v235
      %246 = vst [vmem:[#allocation9 + $0x28] sm:$0xff] %v227
      %247 = vst [vmem:[#allocation9 + $0x30] sm:$0xff] %v236
      %248 = vst [vmem:[#allocation9 + $0x38] sm:$0xff] %v228
      %249 = vst [vmem:[#allocation9 + $0x40] sm:$0xff] %v237
      %250 = vst [vmem:[#allocation9 + $0x48] sm:$0xff] %v229
      %251 = vst [vmem:[#allocation9 + $0x50] sm:$0xff] %v238
      %252 = vst [vmem:[#allocation9 + $0x58] sm:$0xff] %v230
      %253 = vst [vmem:[#allocation9 + $0x60] sm:$0xff] %v239
      %254 = vst [vmem:[#allocation9 + $0x68] sm:$0xff] %v231
      %255 = vst [vmem:[#allocation9 + $0x70] sm:$0xff] %v240
      %256 = vst [vmem:[#allocation9 + $0x78] sm:$0xff] %v232
    $region25: #{tpu_custom_call.1} parent=1 // pred_fallthru
      _
    %s257 = sand.u32 %s45, 4
    %p258 = scmp.ne.s32.totalorder %s257, 0
    // Predicated region
    $region26: #{tpu_custom_call.1} parent=1 // pred_check
      %p259 = pneg %p258
    $region27: #{tpu_custom_call.1} parent=1 // pred_check_branch
      %261 = sbr.rel (%p259) target = $region29
    $region28: #{tpu_custom_call.1} parent=1 // pred_region
      %v262 = vld [vmem:[#allocation9] sm:$0xff]
      %v263 = vld [vmem:[#allocation9 + $0x8] sm:$0xff]
      %v264 = vld [vmem:[#allocation9 + $0x10] sm:$0xff]
      %v265 = vld [vmem:[#allocation9 + $0x18] sm:$0xff]
      %v266 = vld [vmem:[#allocation9 + $0x20] sm:$0xff]
      %v267 = vld [vmem:[#allocation9 + $0x28] sm:$0xff]
      %v268 = vld [vmem:[#allocation9 + $0x30] sm:$0xff]
      %v269 = vld [vmem:[#allocation9 + $0x38] sm:$0xff]
      %v270 = vld [vmem:[#allocation9 + $0x40] sm:$0xff]
      %v271 = vld [vmem:[#allocation9 + $0x48] sm:$0xff]
      %v272 = vld [vmem:[#allocation9 + $0x50] sm:$0xff]
      %v273 = vld [vmem:[#allocation9 + $0x58] sm:$0xff]
      %v274 = vld [vmem:[#allocation9 + $0x60] sm:$0xff]
      %v275 = vld [vmem:[#allocation9 + $0x68] sm:$0xff]
      %v276 = vld [vmem:[#allocation9 + $0x70] sm:$0xff]
      %v277 = vld [vmem:[#allocation9 + $0x78] sm:$0xff]
      %v278 = vrot.slane %v262, 4
      %v279 = vrot.slane %v264, 4
      %v280 = vrot.slane %v266, 4
      %v281 = vrot.slane %v268, 4
      %v282 = vrot.slane %v270, 4
      %v283 = vrot.slane %v272, 4
      %v284 = vrot.slane %v274, 4
      %v285 = vrot.slane %v276, 4
      %v286 = vrot.slane %v263, 4
      %v287 = vrot.slane %v265, 4
      %v288 = vrot.slane %v267, 4
      %v289 = vrot.slane %v269, 4
      %v290 = vrot.slane %v271, 4
      %v291 = vrot.slane %v273, 4
      %v292 = vrot.slane %v275, 4
      %v293 = vrot.slane %v277, 4
      %v294 = vlaneseq
      %v295 = vshrl.u32 %v294, 7
      %vm296 = vcmp.lt.s32.totalorder %v295, 4
      %v297 = vsel %vm296, %v278, %v286
      %v298 = vsel %vm296, %v279, %v287
      %v299 = vsel %vm296, %v280, %v288
      %v300 = vsel %vm296, %v281, %v289
      %v301 = vsel %vm296, %v282, %v290
      %v302 = vsel %vm296, %v283, %v291
      %v303 = vsel %vm296, %v284, %v292
      %v304 = vsel %vm296, %v285, %v293
      %v305 = vsel %vm296, %v286, %v278
      %v306 = vsel %vm296, %v287, %v279
      %v307 = vsel %vm296, %v288, %v280
      %v308 = vsel %vm296, %v289, %v281
      %v309 = vsel %vm296, %v290, %v282
      %v310 = vsel %vm296, %v291, %v283
      %v311 = vsel %vm296, %v292, %v284
      %v312 = vsel %vm296, %v293, %v285
      %313 = vst [vmem:[#allocation9] sm:$0xff] %v305
      %314 = vst [vmem:[#allocation9 + $0x8] sm:$0xff] %v297
      %315 = vst [vmem:[#allocation9 + $0x10] sm:$0xff] %v306
      %316 = vst [vmem:[#allocation9 + $0x18] sm:$0xff] %v298
      %317 = vst [vmem:[#allocation9 + $0x20] sm:$0xff] %v307
      %318 = vst [vmem:[#allocation9 + $0x28] sm:$0xff] %v299
      %319 = vst [vmem:[#allocation9 + $0x30] sm:$0xff] %v308
      %320 = vst [vmem:[#allocation9 + $0x38] sm:$0xff] %v300
      %321 = vst [vmem:[#allocation9 + $0x40] sm:$0xff] %v309
      %322 = vst [vmem:[#allocation9 + $0x48] sm:$0xff] %v301
      %323 = vst [vmem:[#allocation9 + $0x50] sm:$0xff] %v310
      %324 = vst [vmem:[#allocation9 + $0x58] sm:$0xff] %v302
      %325 = vst [vmem:[#allocation9 + $0x60] sm:$0xff] %v311
      %326 = vst [vmem:[#allocation9 + $0x68] sm:$0xff] %v303
      %327 = vst [vmem:[#allocation9 + $0x70] sm:$0xff] %v312
      %328 = vst [vmem:[#allocation9 + $0x78] sm:$0xff] %v304
    $region29: #{tpu_custom_call.1} parent=1 // pred_fallthru
      _
    %s329 = sand.u32 %s45, 8
    %p330 = scmp.ne.s32.totalorder %s329, 0
    // Predicated region
    $region30: #{tpu_custom_call.1} parent=1 // pred_check
      %p331 = pneg %p330
    $region31: #{tpu_custom_call.1} parent=1 // pred_check_branch
      %333 = sbr.rel (%p331) target = $region33
    $region32: #{tpu_custom_call.1} parent=1 // pred_region
      %v334 = vld [vmem:[#allocation9] sm:$0xff]
      %v335 = vld [vmem:[#allocation9 + $0x8] sm:$0xff]
      %v336 = vld [vmem:[#allocation9 + $0x10] sm:$0xff]
      %v337 = vld [vmem:[#allocation9 + $0x18] sm:$0xff]
      %v338 = vld [vmem:[#allocation9 + $0x20] sm:$0xff]
      %v339 = vld [vmem:[#allocation9 + $0x28] sm:$0xff]
      %v340 = vld [vmem:[#allocation9 + $0x30] sm:$0xff]
      %v341 = vld [vmem:[#allocation9 + $0x38] sm:$0xff]
      %v342 = vld [vmem:[#allocation9 + $0x40] sm:$0xff]
      %v343 = vld [vmem:[#allocation9 + $0x48] sm:$0xff]
      %v344 = vld [vmem:[#allocation9 + $0x50] sm:$0xff]
      %v345 = vld [vmem:[#allocation9 + $0x58] sm:$0xff]
      %v346 = vld [vmem:[#allocation9 + $0x60] sm:$0xff]
      %v347 = vld [vmem:[#allocation9 + $0x68] sm:$0xff]
      %v348 = vld [vmem:[#allocation9 + $0x70] sm:$0xff]
      %v349 = vld [vmem:[#allocation9 + $0x78] sm:$0xff]
      %350 = vst [vmem:[#allocation9] sm:$0xff] %v335
      %351 = vst [vmem:[#allocation9 + $0x8] sm:$0xff] %v334
      %352 = vst [vmem:[#allocation9 + $0x10] sm:$0xff] %v337
      %353 = vst [vmem:[#allocation9 + $0x18] sm:$0xff] %v336
      %354 = vst [vmem:[#allocation9 + $0x20] sm:$0xff] %v339
      %355 = vst [vmem:[#allocation9 + $0x28] sm:$0xff] %v338
      %356 = vst [vmem:[#allocation9 + $0x30] sm:$0xff] %v341
      %357 = vst [vmem:[#allocation9 + $0x38] sm:$0xff] %v340
      %358 = vst [vmem:[#allocation9 + $0x40] sm:$0xff] %v343
      %359 = vst [vmem:[#allocation9 + $0x48] sm:$0xff] %v342
      %360 = vst [vmem:[#allocation9 + $0x50] sm:$0xff] %v345
      %361 = vst [vmem:[#allocation9 + $0x58] sm:$0xff] %v344
      %362 = vst [vmem:[#allocation9 + $0x60] sm:$0xff] %v347
      %363 = vst [vmem:[#allocation9 + $0x68] sm:$0xff] %v346
      %364 = vst [vmem:[#allocation9 + $0x70] sm:$0xff] %v349
      %365 = vst [vmem:[#allocation9 + $0x78] sm:$0xff] %v348
    $region33: #{tpu_custom_call.1} parent=1 // pred_fallthru
      _
    %v366 = vld [vmem:[#allocation9] sm:$0xff]
    %v367 = vld [vmem:[#allocation9 + $0x8] sm:$0xff]
    %v368 = vld [vmem:[#allocation9 + $0x10] sm:$0xff]
    %v369 = vld [vmem:[#allocation9 + $0x18] sm:$0xff]
    %v370 = vld [vmem:[#allocation9 + $0x20] sm:$0xff]
    %v371 = vld [vmem:[#allocation9 + $0x28] sm:$0xff]
    %v372 = vld [vmem:[#allocation9 + $0x30] sm:$0xff]
    %v373 = vld [vmem:[#allocation9 + $0x38] sm:$0xff]
    %v374 = vld [vmem:[#allocation9 + $0x40] sm:$0xff]
    %v375 = vld [vmem:[#allocation9 + $0x48] sm:$0xff]
    %v376 = vld [vmem:[#allocation9 + $0x50] sm:$0xff]
    %v377 = vld [vmem:[#allocation9 + $0x58] sm:$0xff]
    %v378 = vld [vmem:[#allocation9 + $0x60] sm:$0xff]
    %v379 = vld [vmem:[#allocation9 + $0x68] sm:$0xff]
    %v380 = vld [vmem:[#allocation9 + $0x70] sm:$0xff]
    %v381 = vld [vmem:[#allocation9 + $0x78] sm:$0xff]
    %v382 = vld [vmem:[#allocation7] sm:$0xff]
    %v383 = vld [vmem:[#allocation7 + $0x8] sm:$0xff]
    %v384 = vmul.f32 %v366, %v382
    %v385 = vmul.f32 %v367, %v383
    %v386 = vmul.f32 %v368, %v382
    %v387 = vmul.f32 %v369, %v383
    %v388 = vmul.f32 %v370, %v382
    %v389 = vmul.f32 %v371, %v383
    %v390 = vmul.f32 %v372, %v382
    %v391 = vmul.f32 %v373, %v383
    %v392 = vmul.f32 %v374, %v382
    %v393 = vmul.f32 %v375, %v383
    %v394 = vmul.f32 %v376, %v382
    %v395 = vmul.f32 %v377, %v383
    %v396 = vmul.f32 %v378, %v382
    %v397 = vmul.f32 %v379, %v383
    %v398 = vmul.f32 %v380, %v382
    %v399 = vmul.f32 %v381, %v383
    %400 = vst [vmem:[#allocation9] sm:$0xff] %v384
    %401 = vst [vmem:[#allocation9 + $0x8] sm:$0xff] %v385
    %402 = vst [vmem:[#allocation9 + $0x10] sm:$0xff] %v386
    %403 = vst [vmem:[#allocation9 + $0x18] sm:$0xff] %v387
    %404 = vst [vmem:[#allocation9 + $0x20] sm:$0xff] %v388
    %405 = vst [vmem:[#allocation9 + $0x28] sm:$0xff] %v389
    %406 = vst [vmem:[#allocation9 + $0x30] sm:$0xff] %v390
    %407 = vst [vmem:[#allocation9 + $0x38] sm:$0xff] %v391
    %408 = vst [vmem:[#allocation9 + $0x40] sm:$0xff] %v392
    %409 = vst [vmem:[#allocation9 + $0x48] sm:$0xff] %v393
    %410 = vst [vmem:[#allocation9 + $0x50] sm:$0xff] %v394
    %411 = vst [vmem:[#allocation9 + $0x58] sm:$0xff] %v395
    %412 = vst [vmem:[#allocation9 + $0x60] sm:$0xff] %v396
    %413 = vst [vmem:[#allocation9 + $0x68] sm:$0xff] %v397
    %414 = vst [vmem:[#allocation9 + $0x70] sm:$0xff] %v398
    %415 = vst [vmem:[#allocation9 + $0x78] sm:$0xff] %v399
    // Predicated region
    $region34: #{tpu_custom_call.1} parent=1 // pred_check
      _
    $region35: #{tpu_custom_call.1} parent=1 // pred_check_branch
      %417 = sbr.rel (0) target = $region37
    $region36: #{tpu_custom_call.1} parent=1 // pred_region
      %s419 = ssub.s32 2048, 2048
      %420 = vsyncadd [#allocation6], %s419
      %s421 = sshll.u32 [#allocation9], 4
      %s422 = int_to_ptr.vmem [resolvable:$true] %s421
      %427 = dma.vmem_to_hbm [thread:$0]  %s422, 2048, %s3, [#allocation6], 128, 128, 8
    $region37: #{tpu_custom_call.1} parent=1 // pred_fallthru
      _
    // Predicated region
    $region38: #{tpu_custom_call.1} parent=1 // pred_check
      _
    $region39: #{tpu_custom_call.1} parent=1 // pred_check_branch
      %429 = sbr.rel (0) target = $region41
    $region40: #{tpu_custom_call.1} parent=1 // pred_region
      %430 = dma.done [#allocation6], 2048
    $region41: #{tpu_custom_call.1} parent=1 // pred_fallthru
      _
    %431 = vsyncpa [#allocation5], 1
    %432 = vsyncpa [#allocation8], 1
    %433 = vsyncpa [#allocation6], 1

</llo_original>
